<compile_context>
chip_gen: v6e
topology: v6e:2x2x1
jax: 0.10.0
libtpu: 0.0.40
codegen_flags: <defaults>
</compile_context>

<pallas_src>
import jax
import jax.numpy as jnp
from jax.experimental import pallas as pl
from jax.experimental.pallas import tpu as pltpu

FEAT = 64          # fixed by nn.Linear(64, 64)
EPS = 1e-12        # F.normalize default eps


def _affinity_kernel(e1_ref, e2_ref, wt_ref, b_ref, mp_ref):
    """Whole problem in one step: normalize -> linear -> relu -> batched GEMM."""
    P, F_, D = e1_ref.shape
    Q = e2_ref.shape[0]

    e1 = e1_ref[...]          # (P, F, 64)
    e2 = e2_ref[...]          # (Q, F, 64)
    wt = wt_ref[...]          # (64, 64), already transposed (in x out)
    b = b_ref[...]            # (1, 64)

    # F.normalize(emb, p=2, dim=1): L2 norm over the frame axis per feature,
    # computed ONCE per instance (hoisted out of the pair loop).
    n1 = jnp.sqrt(jnp.sum(e1 * e1, axis=1, keepdims=True))       # (P, 1, 64)
    e1 = e1 / jnp.maximum(n1, EPS)
    n2 = jnp.sqrt(jnp.sum(e2 * e2, axis=1, keepdims=True))       # (Q, 1, 64)
    e2 = e2 / jnp.maximum(n2, EPS)

    # Flatten to (rows, 64) slabs (F is sublane-aligned, so this is a layout
    # no-op) and run the shared Linear(64,64) + ReLU as one matmul per side.
    e1f = e1.reshape(P * F_, D)
    e2f = e2.reshape(Q * F_, D)
    e1f = jnp.maximum(jnp.dot(e1f, wt, preferred_element_type=jnp.float32) + b, 0.0)
    e2f = jnp.maximum(jnp.dot(e2f, wt, preferred_element_type=jnp.float32) + b, 0.0)

    # All P*Q pairwise affinities as a single GEMM, contracting the feature
    # dims of both operands (MXU-native transposed-RHS form; no e2.T).
    mp_ref[...] = jax.lax.dot_general(
        e1f, e2f,
        dimension_numbers=(((1,), (1,)), ((), ())),
        preferred_element_type=jnp.float32,
    )


def gmnet_node_affinity(out_ins, tgt_ins, weight, bias):
    """out_ins: (P, F, 64), tgt_ins: (Q, F, 64) float32.

    Returns Mp for every (p, q) pair: (P, Q, F, F) float32.
    """
    P, F_, D = out_ins.shape
    Q = tgt_ins.shape[0]
    assert D == FEAT and tgt_ins.shape[1:] == (F_, D)

    wt = weight.T                    # glue: (out,in) -> (in,out)
    b2 = bias.reshape(1, D)          # glue: make bias 2D for VMEM layout

    slab = pl.pallas_call(
        _affinity_kernel,
        out_shape=jax.ShapeDtypeStruct((P * F_, Q * F_), jnp.float32),
        grid=(1,),                   # single step: no per-pair pipeline overhead
        in_specs=[
            pl.BlockSpec((P, F_, D), lambda i: (0, 0, 0)),
            pl.BlockSpec((Q, F_, D), lambda i: (0, 0, 0)),
            pl.BlockSpec((D, D), lambda i: (0, 0)),
            pl.BlockSpec((1, D), lambda i: (0, 0)),
        ],
        out_specs=pl.BlockSpec((P * F_, Q * F_), lambda i: (0, 0)),
        compiler_params=pltpu.CompilerParams(
            dimension_semantics=("arbitrary",)),
    )(out_ins, tgt_ins, wt, b2)

    # Lane-dense (P*F, Q*F) slab -> (P, Q, F, F), the per-pair Mp layout that
    # GMNet.forward() enumerates (cheap XLA reshape/transpose outside kernel).
    return slab.reshape(P, F_, Q, F_).transpose(0, 2, 1, 3)


if __name__ == "__main__":
    key = jax.random.PRNGKey(0)
    # Small shapes consistent with forward(): num_out queries, num_ins targets,
    # each instance is a (num_frame, 64) embedding sequence.
    num_out, num_ins, num_frame = 4, 3, 8
    k1, k2 = jax.random.split(key)
    out_ins = jax.random.normal(k1, (num_out, num_frame, FEAT), dtype=jnp.float32)
    tgt_ins = jax.random.normal(k2, (num_ins, num_frame, FEAT), dtype=jnp.float32)

    # GMNet.__init__: nn.init.eye_(weight), nn.init.constant_(bias, 0)
    weight = jnp.eye(FEAT, dtype=jnp.float32)
    bias = jnp.zeros((FEAT,), dtype=jnp.float32)

    mp = gmnet_node_affinity(out_ins, tgt_ins, weight, bias)
    mp = jax.block_until_ready(mp)

    # Plain-JAX reference of the same fused path for a correctness check.
    def ref_pair(e1, e2):
        n1 = jnp.maximum(jnp.sqrt(jnp.sum(e1 * e1, axis=0, keepdims=True)), EPS)
        n2 = jnp.maximum(jnp.sqrt(jnp.sum(e2 * e2, axis=0, keepdims=True)), EPS)
        a = jnp.maximum((e1 / n1) @ weight.T + bias, 0.0)
        b = jnp.maximum((e2 / n2) @ weight.T + bias, 0.0)
        return a @ b.T

    ref = jnp.stack([
        jnp.stack([ref_pair(out_ins[i], tgt_ins[j]) for j in range(num_ins)])
        for i in range(num_out)
    ])
    assert mp.shape == (num_out, num_ins, num_frame, num_frame)
    assert jnp.allclose(mp, ref, atol=1e-5), "Pallas kernel mismatch vs reference"
    print("KERNEL_OK")
</pallas_src>

<mosaic_0001>
module attributes {stable_mosaic.version = 11 : i64} {
  func.func @_affinity_kernel(%arg0: i32, %arg1: memref<4x8x64xf32, #tpu.memory_space<vmem>>, %arg2: memref<3x8x64xf32, #tpu.memory_space<vmem>>, %arg3: memref<64x64xf32, #tpu.memory_space<vmem>>, %arg4: memref<1x64xf32, #tpu.memory_space<vmem>>, %arg5: memref<32x24xf32, #tpu.memory_space<vmem>>) attributes {dimension_semantics = [#tpu.dimension_semantics<arbitrary>], iteration_bounds = array<i64: 1>, scalar_prefetch = 0 : i64, scratch_operands = 0 : i64, tpu.core_type = #tpu.core_type<tc>, window_params = [{pipeline_mode = #tpu.pipeline_mode<synchronous>, transform_indices = @transform_0, window_bounds = array<i64: 4, 8, 64>}, {pipeline_mode = #tpu.pipeline_mode<synchronous>, transform_indices = @transform_1, window_bounds = array<i64: 3, 8, 64>}, {pipeline_mode = #tpu.pipeline_mode<synchronous>, transform_indices = @transform_2, window_bounds = array<i64: 64, 64>}, {pipeline_mode = #tpu.pipeline_mode<synchronous>, transform_indices = @transform_3, window_bounds = array<i64: 1, 64>}, {pipeline_mode = #tpu.pipeline_mode<synchronous>, transform_indices = @transform_4, window_bounds = array<i64: 32, 24>}]} {
    %c0 = arith.constant 0 : index
    %c0_0 = arith.constant 0 : index
    %c0_1 = arith.constant 0 : index
    %0 = vector.load %arg1[%c0, %c0_0, %c0_1] : memref<4x8x64xf32, #tpu.memory_space<vmem>>, vector<4x8x64xf32>
    %c0_2 = arith.constant 0 : index
    %c0_3 = arith.constant 0 : index
    %c0_4 = arith.constant 0 : index
    %1 = vector.load %arg2[%c0_2, %c0_3, %c0_4] : memref<3x8x64xf32, #tpu.memory_space<vmem>>, vector<3x8x64xf32>
    %c0_5 = arith.constant 0 : index
    %c0_6 = arith.constant 0 : index
    %2 = vector.load %arg3[%c0_5, %c0_6] : memref<64x64xf32, #tpu.memory_space<vmem>>, vector<64x64xf32>
    %c0_7 = arith.constant 0 : index
    %c0_8 = arith.constant 0 : index
    %3 = vector.load %arg4[%c0_7, %c0_8] : memref<1x64xf32, #tpu.memory_space<vmem>>, vector<1x64xf32>
    %4 = arith.mulf %0, %0 : vector<4x8x64xf32>
    %cst = arith.constant dense<0.000000e+00> : vector<4x64xf32>
    %5 = vector.multi_reduction <add>, %4, %cst [1] : vector<4x8x64xf32> to vector<4x64xf32>
    %6 = vector.shape_cast %5 : vector<4x64xf32> to vector<4x1x64xf32>
    %7 = math.sqrt %6 : vector<4x1x64xf32>
    %cst_9 = arith.constant 9.99999996E-13 : f32
    %8 = vector.broadcast %cst_9 : f32 to vector<4x1x64xf32>
    %9 = arith.maximumf %7, %8 : vector<4x1x64xf32>
    %10 = vector.broadcast %9 : vector<4x1x64xf32> to vector<4x8x64xf32>
    %11 = arith.divf %0, %10 : vector<4x8x64xf32>
    %12 = arith.mulf %1, %1 : vector<3x8x64xf32>
    %cst_10 = arith.constant dense<0.000000e+00> : vector<3x64xf32>
    %13 = vector.multi_reduction <add>, %12, %cst_10 [1] : vector<3x8x64xf32> to vector<3x64xf32>
    %14 = vector.shape_cast %13 : vector<3x64xf32> to vector<3x1x64xf32>
    %15 = math.sqrt %14 : vector<3x1x64xf32>
    %cst_11 = arith.constant 9.99999996E-13 : f32
    %16 = vector.broadcast %cst_11 : f32 to vector<3x1x64xf32>
    %17 = arith.maximumf %15, %16 : vector<3x1x64xf32>
    %18 = vector.broadcast %17 : vector<3x1x64xf32> to vector<3x8x64xf32>
    %19 = arith.divf %1, %18 : vector<3x8x64xf32>
    %20 = vector.shape_cast %11 : vector<4x8x64xf32> to vector<32x64xf32>
    %21 = vector.shape_cast %19 : vector<3x8x64xf32> to vector<24x64xf32>
    %cst_12 = arith.constant dense<0.000000e+00> : vector<32x64xf32>
    %22 = tpu.matmul %20, %2, %cst_12 {dimension_numbers = #tpu.dot_dimension_numbers<[1], [0], [0], [1], [0, 0, 1, 1], [], []>} : vector<32x64xf32>, vector<64x64xf32>, vector<32x64xf32> -> vector<32x64xf32>
    %23 = vector.broadcast %3 : vector<1x64xf32> to vector<32x64xf32>
    %24 = arith.addf %22, %23 : vector<32x64xf32>
    %cst_13 = arith.constant 0.000000e+00 : f32
    %25 = vector.broadcast %cst_13 : f32 to vector<32x64xf32>
    %26 = arith.maximumf %24, %25 : vector<32x64xf32>
    %cst_14 = arith.constant dense<0.000000e+00> : vector<24x64xf32>
    %27 = tpu.matmul %21, %2, %cst_14 {dimension_numbers = #tpu.dot_dimension_numbers<[1], [0], [0], [1], [0, 0, 1, 1], [], []>} : vector<24x64xf32>, vector<64x64xf32>, vector<24x64xf32> -> vector<24x64xf32>
    %28 = vector.broadcast %3 : vector<1x64xf32> to vector<24x64xf32>
    %29 = arith.addf %27, %28 : vector<24x64xf32>
    %cst_15 = arith.constant 0.000000e+00 : f32
    %30 = vector.broadcast %cst_15 : f32 to vector<24x64xf32>
    %31 = arith.maximumf %29, %30 : vector<24x64xf32>
    %cst_16 = arith.constant dense<0.000000e+00> : vector<32x24xf32>
    %32 = tpu.matmul %26, %31, %cst_16 {dimension_numbers = #tpu.dot_dimension_numbers<[1], [1], [0], [0], [0, 0, 1, 0], [], []>} : vector<32x64xf32>, vector<24x64xf32>, vector<32x24xf32> -> vector<32x24xf32>
    %c0_17 = arith.constant 0 : index
    %c0_18 = arith.constant 0 : index
    %33 = vector.load %arg5[%c0_17, %c0_18] : memref<32x24xf32, #tpu.memory_space<vmem>>, vector<32x24xf32>
    tpu.vector_store %arg5[%c0_17, %c0_18], %32 {strides = array<i32>} : memref<32x24xf32, #tpu.memory_space<vmem>>, vector<32x24xf32>,
    return
  }
  func.func @transform_0(%arg0: i32) -> (i32, i32, i32) {
    %c0_i32 = arith.constant 0 : i32
    %c0_i32_0 = arith.constant 0 : i32
    %c0_i32_1 = arith.constant 0 : i32
    %c0_i32_2 = arith.constant 0 : i32
    return %c0_i32, %c0_i32_0, %c0_i32_1 : i32, i32, i32
  }
  func.func @transform_1(%arg0: i32) -> (i32, i32, i32) {
    %c0_i32 = arith.constant 0 : i32
    %c0_i32_0 = arith.constant 0 : i32
    %c0_i32_1 = arith.constant 0 : i32
    %c0_i32_2 = arith.constant 0 : i32
    return %c0_i32, %c0_i32_0, %c0_i32_1 : i32, i32, i32
  }
  func.func @transform_2(%arg0: i32) -> (i32, i32) {
    %c0_i32 = arith.constant 0 : i32
    %c0_i32_0 = arith.constant 0 : i32
    %c0_i32_1 = arith.constant 0 : i32
    return %c0_i32, %c0_i32_0 : i32, i32
  }
  func.func @transform_3(%arg0: i32) -> (i32, i32) {
    %c0_i32 = arith.constant 0 : i32
    %c0_i32_0 = arith.constant 0 : i32
    %c0_i32_1 = arith.constant 0 : i32
    return %c0_i32, %c0_i32_0 : i32, i32
  }
  func.func @transform_4(%arg0: i32) -> (i32, i32) {
    %c0_i32 = arith.constant 0 : i32
    %c0_i32_0 = arith.constant 0 : i32
    %c0_i32_1 = arith.constant 0 : i32
    return %c0_i32, %c0_i32_0 : i32, i32
  }
}

</mosaic_0001>

<llo_original>
// kernel: tpu_custom_call.1
$region0: #{tpu_custom_call.1}
  #allocation0 [shape = 'u32[]', space=smem, size = 0x4, offset = 0x4, fixed_abs, tag = 'smem constant byte address 0x4 - core index']
  #allocation1 [shape = 'u32[144,128]{1,0:T(1,128)}', space=vmem, size = 0x12000, scoped, tag = 'internal scratch']
  %s0 = inlined_call_operand.hbm [shape: f32[4,8,64], index: 0, kind: input, shape index: {}]
  %s1 = inlined_call_operand.hbm [shape: f32[3,8,64], index: 1, kind: input, shape index: {}]
  %s2 = inlined_call_operand.hbm [shape: f32[64,64], index: 2, kind: input, shape index: {}]
  %s3 = inlined_call_operand.vmem [shape: f32[1,64], index: 3, kind: input, shape index: {}]
  %s4 = inlined_call_operand.vmem [shape: f32[32,24], index: 4, kind: output, shape index: {}]
  %s5 = sld [smem:[#allocation0]]
  $region38: #{tpu_custom_call.1} parent=0
    _
  %s7 = ssub.s32 1, %s5
  %s8 = scalar_select 0, %s7, %s5
  $region1: #{tpu_custom_call.1} parent=0
    #allocation2 [shape = 'u8[16384]{0}', space=vmem, size = 0x4000, scoped, tag = 'input window, operand 0, single buffered']
    #allocation3 [shape = 's32[1]{0}', space=sflag, size = 0x4, scoped, tag = 'scoped memory for tpu_custom_call.1']
    #allocation4 [shape = 'u8[12288]{0}', space=vmem, size = 0x3000, scoped, tag = 'input window, operand 1, single buffered']
    #allocation5 [shape = 's32[1]{0}', space=sflag, size = 0x4, scoped, tag = 'scoped memory for tpu_custom_call.1']
    #allocation6 [shape = 'u8[32768]{0}', space=vmem, size = 0x8000, scoped, tag = 'input window, operand 2, single buffered']
    %9 = vsyncpa [#allocation3], 0
    %10 = vsyncpa [#allocation5], 0
    // Predicated region
    $region2: #{tpu_custom_call.1} parent=1 // pred_check
      _
    $region3: #{tpu_custom_call.1} parent=1 // pred_check_branch
      %12 = sbr.rel (0) target = $region5
    $region4: #{tpu_custom_call.1} parent=1 // pred_region
      %s14 = ssub.s32 512, 512
      %15 = vsyncadd [#allocation3], %s14
      %s16 = sshll.u32 [#allocation2], 4
      %s17 = int_to_ptr.vmem [resolvable:$true] %s16
      %22 = dma.hbm_to_vmem [thread:$0]  %s0, 512, %s17, [#allocation3], 128, 128, 8
    $region5: #{tpu_custom_call.1} parent=1 // pred_fallthru
      _
    // Predicated region
    $region6: #{tpu_custom_call.1} parent=1 // pred_check
      _
    $region7: #{tpu_custom_call.1} parent=1 // pred_check_branch
      %24 = sbr.rel (0) target = $region9
    $region8: #{tpu_custom_call.1} parent=1 // pred_region
      %s26 = ssub.s32 384, 384
      %27 = vsyncadd [#allocation5], %s26
      %s28 = sshll.u32 [#allocation4], 4
      %s29 = int_to_ptr.vmem [resolvable:$true] %s28
      %34 = dma.hbm_to_vmem [thread:$0]  %s1, 384, %s29, [#allocation5], 128, 128, 8
    $region9: #{tpu_custom_call.1} parent=1 // pred_fallthru
      _
    // Predicated region
    $region10: #{tpu_custom_call.1} parent=1 // pred_check
      _
    $region11: #{tpu_custom_call.1} parent=1 // pred_check_branch
      %36 = sbr.rel (0) target = $region13
    $region12: #{tpu_custom_call.1} parent=1 // pred_region
      %s38 = ssub.s32 1024, 1024
      %39 = vsyncadd [#allocation5], %s38
      %s40 = sshll.u32 [#allocation6], 4
      %s41 = int_to_ptr.vmem [resolvable:$true] %s40
      %46 = dma.hbm_to_vmem [thread:$0]  %s2, 1024, %s41, [#allocation5], 128, 128, 8
    $region13: #{tpu_custom_call.1} parent=1 // pred_fallthru
      _
    // Predicated region
    $region14: #{tpu_custom_call.1} parent=1 // pred_check
      _
    $region15: #{tpu_custom_call.1} parent=1 // pred_check_branch
      %48 = sbr.rel (0) target = $region17
    $region16: #{tpu_custom_call.1} parent=1 // pred_region
      _
    $region17: #{tpu_custom_call.1} parent=1 // pred_fallthru
      _
    // Predicated region
    $region18: #{tpu_custom_call.1} parent=1 // pred_check
      _
    $region19: #{tpu_custom_call.1} parent=1 // pred_check_branch
      %50 = sbr.rel (0) target = $region21
    $region20: #{tpu_custom_call.1} parent=1 // pred_region
      %51 = dma.done [#allocation3], 512
    $region21: #{tpu_custom_call.1} parent=1 // pred_fallthru
      _
    // Predicated region
    $region22: #{tpu_custom_call.1} parent=1 // pred_check
      _
    $region23: #{tpu_custom_call.1} parent=1 // pred_check_branch
      %53 = sbr.rel (0) target = $region25
    $region24: #{tpu_custom_call.1} parent=1 // pred_region
      %54 = dma.done [#allocation5], 384
    $region25: #{tpu_custom_call.1} parent=1 // pred_fallthru
      _
    // Predicated region
    $region26: #{tpu_custom_call.1} parent=1 // pred_check
      _
    $region27: #{tpu_custom_call.1} parent=1 // pred_check_branch
      %56 = sbr.rel (0) target = $region29
    $region28: #{tpu_custom_call.1} parent=1 // pred_region
      %57 = dma.done [#allocation5], 1024
    $region29: #{tpu_custom_call.1} parent=1 // pred_fallthru
      _
    %v58 = vld [vmem:[#allocation2] sm:$0xff]
    %v59 = vld [vmem:[#allocation2 + $0x8] sm:$0xff]
    %v60 = vld [vmem:[#allocation2 + $0x10] sm:$0xff]
    %v61 = vld [vmem:[#allocation2 + $0x18] sm:$0xff]
    %v62 = vld [vmem:[#allocation4] sm:$0xff]
    %v63 = vld [vmem:[#allocation4 + $0x8] sm:$0xff]
    %v64 = vld [vmem:[#allocation4 + $0x10] sm:$0xff]
    %v65 = vld [vmem:[#allocation6] sm:$0xff]
    %v66 = vld [vmem:[#allocation6 + $0x8] sm:$0xff]
    %v67 = vld [vmem:[#allocation6 + $0x10] sm:$0xff]
    %v68 = vld [vmem:[#allocation6 + $0x18] sm:$0xff]
    %v69 = vld [vmem:[#allocation6 + $0x20] sm:$0xff]
    %v70 = vld [vmem:[#allocation6 + $0x28] sm:$0xff]
    %v71 = vld [vmem:[#allocation6 + $0x30] sm:$0xff]
    %v72 = vld [vmem:[#allocation6 + $0x38] sm:$0xff]
    %v73 = vld [vmem:[%s3] sm:$0x1]
    %v74 = vmul.f32 %v58, %v58
    %v75 = vmul.f32 %v59, %v59
    %v76 = vmul.f32 %v60, %v60
    %v77 = vmul.f32 %v61, %v61
    %vm78 = vcmask 523264
    %v79 = vsel %vm78, %v74, 0.0
    %v80 = vrot.slane %v79, 4
    %v81 = vadd.f32 %v79, %v80
    %v82 = vrot.slane %v81, 2
    %v83 = vadd.f32 %v81, %v82
    %v84 = vrot.slane %v83, 1
    %v85 = vadd.f32 %v83, %v84
    %v86 = vsel %vm78, %v75, 0.0
    %v87 = vrot.slane %v86, 4
    %v88 = vadd.f32 %v86, %v87
    %v89 = vrot.slane %v88, 2
    %v90 = vadd.f32 %v88, %v89
    %v91 = vrot.slane %v90, 1
    %v92 = vadd.f32 %v90, %v91
    %v93 = vsel %vm78, %v76, 0.0
    %v94 = vrot.slane %v93, 4
    %v95 = vadd.f32 %v93, %v94
    %v96 = vrot.slane %v95, 2
    %v97 = vadd.f32 %v95, %v96
    %v98 = vrot.slane %v97, 1
    %v99 = vadd.f32 %v97, %v98
    %v100 = vsel %vm78, %v77, 0.0
    %v101 = vrot.slane %v100, 4
    %v102 = vadd.f32 %v100, %v101
    %v103 = vrot.slane %v102, 2
    %v104 = vadd.f32 %v102, %v103
    %v105 = vrot.slane %v104, 1
    %v106 = vadd.f32 %v104, %v105
    %v107 = vrsqrt.pop %v85
    %v108 = vmul.f32 %v85, %v107
    %vm109 = vcmp.eq.f32.partialorder %v85, inf
    %v110 = vsel %vm109, %v85, %v108
    %vm111 = vcmp.eq.f32.partialorder %v85, 0.0
    %v112 = vand.u32 %v85, 2147483648
    %v113 = vsel %vm111, %v112, %v110
    %v114 = vrsqrt.pop %v92
    %v115 = vmul.f32 %v92, %v114
    %vm116 = vcmp.eq.f32.partialorder %v92, inf
    %v117 = vsel %vm116, %v92, %v115
    %vm118 = vcmp.eq.f32.partialorder %v92, 0.0
    %v119 = vand.u32 %v92, 2147483648
    %v120 = vsel %vm118, %v119, %v117
    %v121 = vrsqrt.pop %v99
    %v122 = vmul.f32 %v99, %v121
    %vm123 = vcmp.eq.f32.partialorder %v99, inf
    %v124 = vsel %vm123, %v99, %v122
    %vm125 = vcmp.eq.f32.partialorder %v99, 0.0
    %v126 = vand.u32 %v99, 2147483648
    %v127 = vsel %vm125, %v126, %v124
    %v128 = vrsqrt.pop %v106
    %v129 = vmul.f32 %v106, %v128
    %vm130 = vcmp.eq.f32.partialorder %v106, inf
    %v131 = vsel %vm130, %v106, %v129
    %vm132 = vcmp.eq.f32.partialorder %v106, 0.0
    %v133 = vand.u32 %v106, 2147483648
    %v134 = vsel %vm132, %v133, %v131
    %v135 = vmax.f32 %v113, 1e-12
    %v136 = vmax.f32 %v120, 1e-12
    %v137 = vmax.f32 %v127, 1e-12
    %v138 = vmax.f32 %v134, 1e-12
    %v139 = vrcp.pop %v135
    %v140 = vmul.f32 %v58, %v139
    %v141 = vrcp.pop %v136
    %v142 = vmul.f32 %v59, %v141
    %v143 = vrcp.pop %v137
    %v144 = vmul.f32 %v60, %v143
    %v145 = vrcp.pop %v138
    %v146 = vmul.f32 %v61, %v145
    %v147 = vmul.f32 %v62, %v62
    %v148 = vmul.f32 %v63, %v63
    %v149 = vmul.f32 %v64, %v64
    %v150 = vsel %vm78, %v147, 0.0
    %v151 = vrot.slane %v150, 4
    %v152 = vadd.f32 %v150, %v151
    %v153 = vrot.slane %v152, 2
    %v154 = vadd.f32 %v152, %v153
    %v155 = vrot.slane %v154, 1
    %v156 = vadd.f32 %v154, %v155
    %v157 = vsel %vm78, %v148, 0.0
    %v158 = vrot.slane %v157, 4
    %v159 = vadd.f32 %v157, %v158
    %v160 = vrot.slane %v159, 2
    %v161 = vadd.f32 %v159, %v160
    %v162 = vrot.slane %v161, 1
    %v163 = vadd.f32 %v161, %v162
    %v164 = vsel %vm78, %v149, 0.0
    %v165 = vrot.slane %v164, 4
    %v166 = vadd.f32 %v164, %v165
    %v167 = vrot.slane %v166, 2
    %v168 = vadd.f32 %v166, %v167
    %v169 = vrot.slane %v168, 1
    %v170 = vadd.f32 %v168, %v169
    %v171 = vrsqrt.pop %v156
    %v172 = vmul.f32 %v156, %v171
    %vm173 = vcmp.eq.f32.partialorder %v156, inf
    %v174 = vsel %vm173, %v156, %v172
    %vm175 = vcmp.eq.f32.partialorder %v156, 0.0
    %v176 = vand.u32 %v156, 2147483648
    %v177 = vsel %vm175, %v176, %v174
    %v178 = vrsqrt.pop %v163
    %v179 = vmul.f32 %v163, %v178
    %vm180 = vcmp.eq.f32.partialorder %v163, inf
    %v181 = vsel %vm180, %v163, %v179
    %vm182 = vcmp.eq.f32.partialorder %v163, 0.0
    %v183 = vand.u32 %v163, 2147483648
    %v184 = vsel %vm182, %v183, %v181
    %v185 = vrsqrt.pop %v170
    %v186 = vmul.f32 %v170, %v185
    %vm187 = vcmp.eq.f32.partialorder %v170, inf
    %v188 = vsel %vm187, %v170, %v186
    %vm189 = vcmp.eq.f32.partialorder %v170, 0.0
    %v190 = vand.u32 %v170, 2147483648
    %v191 = vsel %vm189, %v190, %v188
    %v192 = vmax.f32 %v177, 1e-12
    %v193 = vmax.f32 %v184, 1e-12
    %v194 = vmax.f32 %v191, 1e-12
    %v195 = vrcp.pop %v192
    %v196 = vmul.f32 %v62, %v195
    %v197 = vrcp.pop %v193
    %v198 = vmul.f32 %v63, %v197
    %v199 = vrcp.pop %v194
    %v200 = vmul.f32 %v64, %v199
    %v202 = vlaneseq
    %v203 = vshrl.u32 %v202, 7
    %v204 = vsub.s32 0, %v203
    %v205 = vrot.slane %v73, %v204
    %v208 = vsel %vm78, %v140, 0
    %v211 = vsel %vm78, %v142, 0
    %v214 = vsel %vm78, %v144, 0
    %v217 = vsel %vm78, %v146, 0
    %219 = vmatprep.subr.mxu0 0.0
    %220 = vmatpush1.msra.mxu0 0.0
    %221 = vmatprep.subr.mxu0 0.0
    %222 = vmatpush1.msra.mxu0 0.0
    %223 = vmatprep.subr.mxu0 0.0
    %224 = vmatpush1.msra.mxu0 0.0
    %225 = vmatprep.subr.mxu0 0.0
    %226 = vmatpush1.msra.mxu0 0.0
    %227 = vmatprep.subr.mxu0 0.0
    %228 = vmatpush1.msra.mxu0 0.0
    %229 = vmatprep.subr.mxu0 0.0
    %230 = vmatpush1.msra.mxu0 0.0
    %231 = vmatprep.subr.mxu0 0.0
    %232 = vmatpush1.msra.mxu0 0.0
    %233 = vmatprep.subr.mxu0 0.0
    %234 = vmatpush1.msra.mxu0 0.0
    %235 = vmatprep.subr.mxu0 0.0
    %236 = vmatpush1.msra.mxu0 %v72
    %237 = vmatprep.subr.mxu0 0.0
    %238 = vmatpush1.msra.mxu0 %v71
    %239 = vmatprep.subr.mxu0 0.0
    %240 = vmatpush1.msra.mxu0 %v70
    %241 = vmatprep.subr.mxu0 0.0
    %242 = vmatpush1.msra.mxu0 %v69
    %243 = vmatprep.subr.mxu0 0.0
    %244 = vmatpush1.msra.mxu0 %v68
    %245 = vmatprep.subr.mxu0 0.0
    %246 = vmatpush1.msra.mxu0 %v67
    %247 = vmatprep.subr.mxu0 0.0
    %248 = vmatpush1.msra.mxu0 %v66
    %249 = vmatprep.subr.mxu0 0.0
    %250 = vmatpush1.msra.mxu0 %v65
    %251 = vmatprep.subr.mxu0 0.0
    %252 = vmatpush2.msra.mxu0 0.0
    %253 = vmatprep.subr.mxu0 0.0
    %254 = vmatpush2.msra.mxu0 0.0
    %255 = vmatprep.subr.mxu0 0.0
    %256 = vmatpush2.msra.mxu0 0.0
    %257 = vmatprep.subr.mxu0 0.0
    %258 = vmatpush2.msra.mxu0 0.0
    %259 = vmatprep.subr.mxu0 0.0
    %260 = vmatpush2.msra.mxu0 0.0
    %261 = vmatprep.subr.mxu0 0.0
    %262 = vmatpush2.msra.mxu0 0.0
    %263 = vmatprep.subr.mxu0 0.0
    %264 = vmatpush2.msra.mxu0 0.0
    %265 = vmatprep.subr.mxu0 0.0
    %266 = vmatpush2.msra.mxu0 0.0
    %267 = vmatprep.subr.mxu0 0.0
    %268 = vmatpush2.msra.mxu0 0.0
    %269 = vmatprep.subr.mxu0 0.0
    %270 = vmatpush2.msra.mxu0 0.0
    %271 = vmatprep.subr.mxu0 0.0
    %272 = vmatpush2.msra.mxu0 0.0
    %273 = vmatprep.subr.mxu0 0.0
    %274 = vmatpush2.msra.mxu0 0.0
    %275 = vmatprep.subr.mxu0 0.0
    %276 = vmatpush2.msra.mxu0 0.0
    %277 = vmatprep.subr.mxu0 0.0
    %278 = vmatpush2.msra.mxu0 0.0
    %279 = vmatprep.subr.mxu0 0.0
    %280 = vmatpush2.msra.mxu0 0.0
    %281 = vmatprep.subr.mxu0 0.0
    %282 = vmatpush2.msra.mxu0 0.0
    %283 = vmatprep.mubr.f32.mxu0 0.0
    %284 = vmatmul.mubr.f32.gmra.mxu0 %v208
    %v285 = vpop.f32.mrf.mxu0
    %v286 = vadd.f32 %v205, %v285
    %v287 = vpop.f32.mrf.mxu0
    %288 = vmatprep.mubr.f32.mxu0 0.0
    %289 = vmatmul.mubr.f32.gmra.mxu0 %v211
    %v290 = vpop.f32.mrf.mxu0
    %v291 = vadd.f32 %v205, %v290
    %v292 = vpop.f32.mrf.mxu0
    %293 = vmatprep.mubr.f32.mxu0 0.0
    %294 = vmatmul.mubr.f32.gmra.mxu0 %v214
    %v295 = vpop.f32.mrf.mxu0
    %v296 = vadd.f32 %v205, %v295
    %v297 = vpop.f32.mrf.mxu0
    %298 = vmatprep.mubr.f32.mxu0 0.0
    %299 = vmatmul.mubr.f32.gmra.mxu0 %v217
    %v300 = vpop.f32.mrf.mxu0
    %v301 = vadd.f32 %v205, %v300
    %v302 = vpop.f32.mrf.mxu0
    %303 = vdwg.mxu0
    %v304 = vmax.f32 %v286, 0.0
    %v305 = vmax.f32 %v291, 0.0
    %v306 = vmax.f32 %v296, 0.0
    %v307 = vmax.f32 %v301, 0.0
    %v309 = vsel %vm78, %v196, 0
    %v312 = vsel %vm78, %v198, 0
    %v315 = vsel %vm78, %v200, 0
    %317 = vmatprep.subr.mxu0 0.0
    %318 = vmatpush1.msra.mxu0 0.0
    %319 = vmatprep.subr.mxu0 0.0
    %320 = vmatpush1.msra.mxu0 0.0
    %321 = vmatprep.subr.mxu0 0.0
    %322 = vmatpush1.msra.mxu0 0.0
    %323 = vmatprep.subr.mxu0 0.0
    %324 = vmatpush1.msra.mxu0 0.0
    %325 = vmatprep.subr.mxu0 0.0
    %326 = vmatpush1.msra.mxu0 0.0
    %327 = vmatprep.subr.mxu0 0.0
    %328 = vmatpush1.msra.mxu0 0.0
    %329 = vmatprep.subr.mxu0 0.0
    %330 = vmatpush1.msra.mxu0 0.0
    %331 = vmatprep.subr.mxu0 0.0
    %332 = vmatpush1.msra.mxu0 0.0
    %333 = vmatprep.subr.mxu0 0.0
    %334 = vmatpush1.msra.mxu0 %v72
    %335 = vmatprep.subr.mxu0 0.0
    %336 = vmatpush1.msra.mxu0 %v71
    %337 = vmatprep.subr.mxu0 0.0
    %338 = vmatpush1.msra.mxu0 %v70
    %339 = vmatprep.subr.mxu0 0.0
    %340 = vmatpush1.msra.mxu0 %v69
    %341 = vmatprep.subr.mxu0 0.0
    %342 = vmatpush1.msra.mxu0 %v68
    %343 = vmatprep.subr.mxu0 0.0
    %344 = vmatpush1.msra.mxu0 %v67
    %345 = vmatprep.subr.mxu0 0.0
    %346 = vmatpush1.msra.mxu0 %v66
    %347 = vmatprep.subr.mxu0 0.0
    %348 = vmatpush1.msra.mxu0 %v65
    %349 = vmatprep.subr.mxu0 0.0
    %350 = vmatpush2.msra.mxu0 0.0
    %351 = vmatprep.subr.mxu0 0.0
    %352 = vmatpush2.msra.mxu0 0.0
    %353 = vmatprep.subr.mxu0 0.0
    %354 = vmatpush2.msra.mxu0 0.0
    %355 = vmatprep.subr.mxu0 0.0
    %356 = vmatpush2.msra.mxu0 0.0
    %357 = vmatprep.subr.mxu0 0.0
    %358 = vmatpush2.msra.mxu0 0.0
    %359 = vmatprep.subr.mxu0 0.0
    %360 = vmatpush2.msra.mxu0 0.0
    %361 = vmatprep.subr.mxu0 0.0
    %362 = vmatpush2.msra.mxu0 0.0
    %363 = vmatprep.subr.mxu0 0.0
    %364 = vmatpush2.msra.mxu0 0.0
    %365 = vmatprep.subr.mxu0 0.0
    %366 = vmatpush2.msra.mxu0 0.0
    %367 = vmatprep.subr.mxu0 0.0
    %368 = vmatpush2.msra.mxu0 0.0
    %369 = vmatprep.subr.mxu0 0.0
    %370 = vmatpush2.msra.mxu0 0.0
    %371 = vmatprep.subr.mxu0 0.0
    %372 = vmatpush2.msra.mxu0 0.0
    %373 = vmatprep.subr.mxu0 0.0
    %374 = vmatpush2.msra.mxu0 0.0
    %375 = vmatprep.subr.mxu0 0.0
    %376 = vmatpush2.msra.mxu0 0.0
    %377 = vmatprep.subr.mxu0 0.0
    %378 = vmatpush2.msra.mxu0 0.0
    %379 = vmatprep.subr.mxu0 0.0
    %380 = vmatpush2.msra.mxu0 0.0
    %381 = vmatprep.mubr.f32.mxu0 0.0
    %382 = vmatmul.mubr.f32.gmra.mxu0 %v309
    %v383 = vpop.f32.mrf.mxu0
    %v384 = vadd.f32 %v205, %v383
    %v385 = vpop.f32.mrf.mxu0
    %386 = vmatprep.mubr.f32.mxu0 0.0
    %387 = vmatmul.mubr.f32.gmra.mxu0 %v312
    %v388 = vpop.f32.mrf.mxu0
    %v389 = vadd.f32 %v205, %v388
    %v390 = vpop.f32.mrf.mxu0
    %391 = vmatprep.mubr.f32.mxu0 0.0
    %392 = vmatmul.mubr.f32.gmra.mxu0 %v315
    %v393 = vpop.f32.mrf.mxu0
    %v394 = vadd.f32 %v205, %v393
    %v395 = vpop.f32.mrf.mxu0
    %396 = vdwg.mxu0
    %v397 = vmax.f32 %v384, 0.0
    %v398 = vmax.f32 %v389, 0.0
    %v399 = vmax.f32 %v394, 0.0
    %v401 = vsel %vm78, %v304, 0
    %v404 = vsel %vm78, %v305, 0
    %v407 = vsel %vm78, %v306, 0
    %v410 = vsel %vm78, %v307, 0
    %v413 = vsel %vm78, %v397, 0
    %v416 = vsel %vm78, %v398, 0
    %v419 = vsel %vm78, %v399, 0
    %421 = vmatprep.subr.mxu0 0.0
    %422 = vmatpush1.xpose.msra.mxu0 0.0
    %423 = vmatprep.subr.mxu0 0.0
    %424 = vmatpush1.xpose.msra.mxu0 0.0
    %425 = vmatprep.subr.mxu0 0.0
    %426 = vmatpush1.xpose.msra.mxu0 0.0
    %427 = vmatprep.subr.mxu0 0.0
    %428 = vmatpush1.xpose.msra.mxu0 0.0
    %429 = vmatprep.subr.mxu0 0.0
    %430 = vmatpush1.xpose.msra.mxu0 0.0
    %431 = vmatprep.subr.mxu0 0.0
    %432 = vmatpush1.xpose.msra.mxu0 0.0
    %433 = vmatprep.subr.mxu0 0.0
    %434 = vmatpush1.xpose.msra.mxu0 0.0
    %435 = vmatprep.subr.mxu0 0.0
    %436 = vmatpush1.xpose.msra.mxu0 0.0
    %437 = vmatprep.subr.mxu0 0.0
    %438 = vmatpush1.xpose.msra.mxu0 0.0
    %439 = vmatprep.subr.mxu0 0.0
    %440 = vmatpush1.xpose.msra.mxu0 0.0
    %441 = vmatprep.subr.mxu0 0.0
    %442 = vmatpush1.xpose.msra.mxu0 0.0
    %443 = vmatprep.subr.mxu0 0.0
    %444 = vmatpush1.xpose.msra.mxu0 0.0
    %445 = vmatprep.subr.mxu0 0.0
    %446 = vmatpush1.xpose.msra.mxu0 0.0
    %447 = vmatprep.subr.mxu0 0.0
    %448 = vmatpush1.xpose.msra.mxu0 %v419
    %449 = vmatprep.subr.mxu0 0.0
    %450 = vmatpush1.xpose.msra.mxu0 %v416
    %451 = vmatprep.subr.mxu0 0.0
    %452 = vmatpush1.xpose.msra.mxu0 %v413
    %453 = vmatprep.subr.mxu0 0.0
    %454 = vmatpush2.xpose.msra.mxu0 0.0
    %455 = vmatprep.subr.mxu0 0.0
    %456 = vmatpush2.xpose.msra.mxu0 0.0
    %457 = vmatprep.subr.mxu0 0.0
    %458 = vmatpush2.xpose.msra.mxu0 0.0
    %459 = vmatprep.subr.mxu0 0.0
    %460 = vmatpush2.xpose.msra.mxu0 0.0
    %461 = vmatprep.subr.mxu0 0.0
    %462 = vmatpush2.xpose.msra.mxu0 0.0
    %463 = vmatprep.subr.mxu0 0.0
    %464 = vmatpush2.xpose.msra.mxu0 0.0
    %465 = vmatprep.subr.mxu0 0.0
    %466 = vmatpush2.xpose.msra.mxu0 0.0
    %467 = vmatprep.subr.mxu0 0.0
    %468 = vmatpush2.xpose.msra.mxu0 0.0
    %469 = vmatprep.subr.mxu0 0.0
    %470 = vmatpush2.xpose.msra.mxu0 0.0
    %471 = vmatprep.subr.mxu0 0.0
    %472 = vmatpush2.xpose.msra.mxu0 0.0
    %473 = vmatprep.subr.mxu0 0.0
    %474 = vmatpush2.xpose.msra.mxu0 0.0
    %475 = vmatprep.subr.mxu0 0.0
    %476 = vmatpush2.xpose.msra.mxu0 0.0
    %477 = vmatprep.subr.mxu0 0.0
    %478 = vmatpush2.xpose.msra.mxu0 0.0
    %479 = vmatprep.subr.mxu0 0.0
    %480 = vmatpush2.xpose.msra.mxu0 0.0
    %481 = vmatprep.subr.mxu0 0.0
    %482 = vmatpush2.xpose.msra.mxu0 0.0
    %483 = vmatprep.subr.mxu0 0.0
    %484 = vmatpush2.xpose.msra.mxu0 0.0
    %485 = vmatprep.mubr.f32.mxu0 0.0
    %486 = vmatmul.mubr.f32.gmra.mxu0 %v401
    %v487 = vpop.f32.mrf.mxu0
    %v488 = vadd.f32 0.0, %v487
    %v489 = vpop.f32.mrf.mxu0
    %490 = vmatprep.mubr.f32.mxu0 0.0
    %491 = vmatmul.mubr.f32.gmra.mxu0 %v404
    %v492 = vpop.f32.mrf.mxu0
    %v493 = vadd.f32 0.0, %v492
    %v494 = vpop.f32.mrf.mxu0
    %495 = vmatprep.mubr.f32.mxu0 0.0
    %496 = vmatmul.mubr.f32.gmra.mxu0 %v407
    %v497 = vpop.f32.mrf.mxu0
    %v498 = vadd.f32 0.0, %v497
    %v499 = vpop.f32.mrf.mxu0
    %500 = vmatprep.mubr.f32.mxu0 0.0
    %501 = vmatmul.mubr.f32.gmra.mxu0 %v410
    %v502 = vpop.f32.mrf.mxu0
    %v503 = vadd.f32 0.0, %v502
    %v504 = vpop.f32.mrf.mxu0
    %505 = vdwg.mxu0
    %vm506 = vcmask 195584
    %507 = vst.msk [vmem:[%s4] sm:$0xff] %vm506, %v488
    %508 = vst.msk [vmem:[%s4 + $0x8] sm:$0xff] %vm506, %v493
    %509 = vst.msk [vmem:[%s4 + $0x10] sm:$0xff] %vm506, %v498
    %510 = vst.msk [vmem:[%s4 + $0x18] sm:$0xff] %vm506, %v503
    // Predicated region
    $region30: #{tpu_custom_call.1} parent=1 // pred_check
      _
    $region31: #{tpu_custom_call.1} parent=1 // pred_check_branch
      %512 = sbr.rel (0) target = $region33
    $region32: #{tpu_custom_call.1} parent=1 // pred_region
      _
    $region33: #{tpu_custom_call.1} parent=1 // pred_fallthru
      _
    // Predicated region
    $region34: #{tpu_custom_call.1} parent=1 // pred_check
      _
    $region35: #{tpu_custom_call.1} parent=1 // pred_check_branch
      %514 = sbr.rel (0) target = $region37
    $region36: #{tpu_custom_call.1} parent=1 // pred_region
      _
    $region37: #{tpu_custom_call.1} parent=1 // pred_fallthru
      _
    %515 = vsyncpa [#allocation3], 1
    %516 = vsyncpa [#allocation5], 1

</llo_original>
